<compile_context>
chip_gen: v6e
topology: v6e:2x2x1
jax: 0.10.0
libtpu: 0.0.40
codegen_flags: <defaults>
</compile_context>

<pallas_src>
import functools

import numpy as np

import jax
import jax.numpy as jnp
from jax.experimental import pallas as pl
from jax.experimental.pallas import tpu as pltpu


# --------------------------- host-side weight prep ---------------------------

def _banded_weights(w, W, dtype=jnp.bfloat16):
    """(3,3,Cin,Cout) HWIO weights -> (3, W*Cin, W*Cout) banded matrices.

    Band[dh, iw*Cin + ci, ow*Cout + co] = w[dh, iw-ow+1, ci, co] when
    0 <= iw-ow+1 < 3, else 0.  A lane-dense activation row (W*Cin,) times
    Band[dh] yields that kernel-row's contribution to the lane-dense output
    row (W*Cout,); zero padding along W is folded in (out-of-range taps simply
    have no band entry).  Built host-side with numpy (no trace overhead).
    """
    w = np.asarray(w, np.float32)
    Cin, Cout = w.shape[2], w.shape[3]
    bands = np.zeros((3, W * Cin, W * Cout), np.float32)
    for dh in range(3):
        for ow in range(W):
            for dw in range(3):
                iw = ow + dw - 1
                if 0 <= iw < W:
                    bands[dh, iw * Cin:(iw + 1) * Cin,
                          ow * Cout:(ow + 1) * Cout] = w[dh, dw]
    return jnp.asarray(bands, dtype)


# --------------------------- Pallas kernels ----------------------------------

def _conv3x3_kernel(*refs, H, W, Cin, Cout, apply_relu, fuse_pool):
    # refs: x(1,H,W*Cin) f32, bands(3,W*Cin,W*Cout) bf16, bias(1,W*Cout) f32,
    #       out(1,H,W*Cout)[, pooled(1,H//2,(W//2)*Cout)], xpad scratch.
    if fuse_pool:
        x_ref, w_ref, b_ref, o_ref, p_ref, xpad_ref = refs
    else:
        x_ref, w_ref, b_ref, o_ref, xpad_ref = refs
        p_ref = None

    # H-halo padded copy of the lane-dense slab.  Halo rows are zeroed EVERY
    # step (two full-lane-width stores) -> per-TensorCore-safe under a
    # "parallel" batch axis; no reliance on scratch state from other steps.
    zero_row = jnp.zeros((1, W * Cin), dtype=xpad_ref.dtype)
    xpad_ref[0:1, :] = zero_row
    xpad_ref[H + 1:H + 2, :] = zero_row
    xpad_ref[1:H + 1, :] = x_ref[0]

    # Three lane-dense MXU dots (one per kernel row dh), bf16 in / f32 acc.
    # Operands are contiguous sublane slices of the scratch -> no relayouts.
    acc = jnp.zeros((H, W * Cout), jnp.float32)
    for dh in range(3):
        a = xpad_ref[dh:dh + H, :].astype(jnp.bfloat16)
        acc = acc + jnp.dot(a, w_ref[dh], preferred_element_type=jnp.float32)

    # Fused epilogue: bias (+ ReLU).  acc already has the lane-dense output
    # layout, so the store needs no cross-lane repack.
    out = acc + b_ref[...]
    if apply_relu:
        out = jnp.maximum(out, 0.0)
    o_ref[...] = out.reshape(1, H, W * Cout).astype(o_ref.dtype)

    # Optional fused 2x2 stride-2 max pool on the slab already in registers
    # (saves the standalone pool's full HBM write + read).
    if fuse_pool:
        Ho, Wo = H // 2, W // 2
        v = out.reshape(Ho, 2, W * Cout)
        v = jnp.maximum(v[:, 0, :], v[:, 1, :])             # row-pair max
        v = v.reshape(Ho, Wo, 2 * Cout)
        v = jnp.maximum(v[:, :, :Cout], v[:, :, Cout:])     # col-pair max
        p_ref[...] = v.reshape(1, Ho, Wo * Cout).astype(p_ref.dtype)


def _relu_kernel(x_ref, o_ref):
    # Standalone ReLU fallback (only when fusion into a conv is illegal).
    o_ref[...] = jnp.maximum(x_ref[...], 0.0)


def _maxpool_kernel(x_ref, o_ref, *, c):
    # Standalone 2x2/2 max pool on a lane-dense (1, H, W*c) block.
    _, H, WC = x_ref.shape
    Ho = H // 2
    Wo = WC // (2 * c)
    v = x_ref[0].reshape(Ho, 2, WC)
    v = jnp.maximum(v[:, 0, :], v[:, 1, :])                 # row-pair max
    v = v.reshape(Ho, Wo, 2 * c)
    v = jnp.maximum(v[:, :, :c], v[:, :, c:])               # col-pair max
    o_ref[...] = v.reshape(1, Ho, Wo * c)


# --------------------------- wrappers -----------------------------------------

def conv3x3(x, w, b, *, apply_relu=False, fuse_pool=False):
    """3x3 conv, stride 1, SAME pad, with optional fused ReLU and 2x2 max pool.

    x: (N,H,W,Cin) f32, w: (3,3,Cin,Cout) HWIO, b: (Cout,).
    Returns (N,H,W,Cout), or a tuple (full, pooled) when fuse_pool=True.
    """
    N, H, W, Cin = x.shape
    Cout = w.shape[-1]
    if fuse_pool:
        assert H % 2 == 0 and W % 2 == 0
    Ho, Wo = H // 2, W // 2

    bands = _banded_weights(w, W)                           # bf16 MXU feed
    b_tiled = jnp.tile(jnp.asarray(b, jnp.float32), W).reshape(1, W * Cout)
    x2 = x.reshape(N, H, W * Cin)                           # lane-dense view

    if fuse_pool:
        out_shape = (jax.ShapeDtypeStruct((N, H, W * Cout), jnp.float32),
                     jax.ShapeDtypeStruct((N, Ho, Wo * Cout), jnp.float32))
        out_specs = (pl.BlockSpec((1, H, W * Cout), lambda n: (n, 0, 0)),
                     pl.BlockSpec((1, Ho, Wo * Cout), lambda n: (n, 0, 0)))
    else:
        out_shape = jax.ShapeDtypeStruct((N, H, W * Cout), jnp.float32)
        out_specs = pl.BlockSpec((1, H, W * Cout), lambda n: (n, 0, 0))

    kernel = functools.partial(_conv3x3_kernel, H=H, W=W, Cin=Cin, Cout=Cout,
                               apply_relu=apply_relu, fuse_pool=fuse_pool)
    res = pl.pallas_call(
        kernel,
        out_shape=out_shape,
        grid_spec=pltpu.PrefetchScalarGridSpec(
            num_scalar_prefetch=0,
            grid=(N,),
            in_specs=[
                pl.BlockSpec((1, H, W * Cin), lambda n: (n, 0, 0)),
                pl.BlockSpec((3, W * Cin, W * Cout), lambda n: (0, 0, 0)),
                pl.BlockSpec((1, W * Cout), lambda n: (0, 0)),
            ],
            out_specs=out_specs,
            scratch_shapes=[pltpu.VMEM((H + 2, W * Cin), jnp.float32)],
        ),
        compiler_params=pltpu.CompilerParams(
            dimension_semantics=("parallel",)),
    )(x2, bands, b_tiled)

    if fuse_pool:
        full, pooled = res
        return full.reshape(N, H, W, Cout), pooled.reshape(N, Ho, Wo, Cout)
    return res.reshape(N, H, W, Cout)


def relu(x):
    """Standalone ReLU on lane-dense blocks (only when fusion is illegal)."""
    N, H, W, C = x.shape
    xf = x.reshape(N, H, W * C)
    out = pl.pallas_call(
        _relu_kernel,
        out_shape=jax.ShapeDtypeStruct((N, H, W * C), x.dtype),
        grid_spec=pltpu.PrefetchScalarGridSpec(
            num_scalar_prefetch=0,
            grid=(N,),
            in_specs=[pl.BlockSpec((1, H, W * C), lambda n: (n, 0, 0))],
            out_specs=pl.BlockSpec((1, H, W * C), lambda n: (n, 0, 0)),
        ),
        compiler_params=pltpu.CompilerParams(
            dimension_semantics=("parallel",)),
    )(xf)
    return out.reshape(N, H, W, C)


def maxpool2x2(x):
    """Standalone 2x2/2 max pool (nn.MaxPool2d(2,2) floor semantics)."""
    N, H, W, C = x.shape
    Ho, Wo = H // 2, W // 2
    x2 = x[:, :2 * Ho, :2 * Wo, :].reshape(N, 2 * Ho, 2 * Wo * C)
    out = pl.pallas_call(
        functools.partial(_maxpool_kernel, c=C),
        out_shape=jax.ShapeDtypeStruct((N, Ho, Wo * C), x.dtype),
        grid_spec=pltpu.PrefetchScalarGridSpec(
            num_scalar_prefetch=0,
            grid=(N,),
            in_specs=[pl.BlockSpec((1, 2 * Ho, 2 * Wo * C), lambda n: (n, 0, 0))],
            out_specs=pl.BlockSpec((1, Ho, Wo * C), lambda n: (n, 0, 0)),
        ),
        compiler_params=pltpu.CompilerParams(
            dimension_semantics=("parallel",)),
    )(x2)
    return out.reshape(N, Ho, Wo, C)


# ----------------- VGG_FeatureExtractor equivalent ---------------------------

class VGGFeatureExtractorPallas:
    """Mirrors the torch module: iterate layers, save named activations.

    conv -> relu (-> pool) chains are fused into a single Pallas call whenever
    legal (identical results either way); the pre-pool activation is still
    emitted so saved relu features are available.
    """

    def __init__(self, vgg_layers, name_list, layers_to_save):
        self.vgg_layers = vgg_layers   # [("conv", w, b) | ("relu",) | ("pool",)]
        self.name_list = name_list
        self.layers_to_save = set(layers_to_save)

    def __call__(self, x_nchw):
        # PyTorch NCHW in -> NHWC for the TPU kernels -> NCHW features out.
        x = jnp.transpose(x_nchw, (0, 2, 3, 1)).astype(jnp.float32)
        out = {}
        layers = self.vgg_layers
        n_layers = len(layers)
        i = 0
        while i < n_layers:
            kind = layers[i][0]
            if kind == "conv":
                _, w, b = layers[i]
                conv_name = self.name_list[str(i)]
                j = i + 1
                fuse_relu = (j < n_layers and layers[j][0] == "relu"
                             and conv_name not in self.layers_to_save)
                if fuse_relu:
                    j += 1
                fuse_pool = (j < n_layers and layers[j][0] == "pool")

                res = conv3x3(x, w, b, apply_relu=fuse_relu,
                              fuse_pool=fuse_pool)
                x_full, x_pool = (res if fuse_pool else (res, None))

                if conv_name in self.layers_to_save:
                    out[conv_name] = jnp.transpose(x_full, (0, 3, 1, 2))
                if fuse_relu:
                    relu_name = self.name_list[str(i + 1)]
                    if relu_name in self.layers_to_save:
                        out[relu_name] = jnp.transpose(x_full, (0, 3, 1, 2))
                if fuse_pool:
                    pool_name = self.name_list[str(j)]
                    if pool_name in self.layers_to_save:
                        out[pool_name] = jnp.transpose(x_pool, (0, 3, 1, 2))
                    x = x_pool
                    i = j + 1
                else:
                    x = x_full
                    i = j
                continue
            elif kind == "relu":
                x = relu(x)
            elif kind == "pool":
                x = maxpool2x2(x)
            name = self.name_list[str(i)]
            if name in self.layers_to_save:
                out[name] = jnp.transpose(x, (0, 3, 1, 2))
            i += 1
        return out


def make_vgg_layers(key, config):
    """Deterministic synthetic VGG weights (HWIO conv layout)."""
    layers = []
    for item in config:
        if item[0] == "conv":
            _, cin, cout = item
            key, kw, kb = jax.random.split(key, 3)
            w = jax.random.normal(kw, (3, 3, cin, cout), jnp.float32)
            w = w * (1.0 / (3 * 3 * cin) ** 0.5)
            b = 0.01 * jax.random.normal(kb, (cout,), jnp.float32)
            layers.append(("conv", w, b))
        else:
            layers.append(item)
    return layers


def reference_forward(x_nchw, layers, name_list, layers_to_save):
    """Pure-JAX reference with matching numerics (bf16 MXU in, f32 accumulate)."""
    layers_to_save = set(layers_to_save)
    x = jnp.transpose(x_nchw, (0, 2, 3, 1)).astype(jnp.float32)
    out = {}
    for i, layer in enumerate(layers):
        kind = layer[0]
        if kind == "conv":
            _, w, b = layer
            y = jax.lax.conv_general_dilated(
                x.astype(jnp.bfloat16), w.astype(jnp.bfloat16),
                window_strides=(1, 1), padding="SAME",
                dimension_numbers=("NHWC", "HWIO", "NHWC"),
                preferred_element_type=jnp.float32)
            x = y + b.astype(jnp.float32)
        elif kind == "relu":
            x = jnp.maximum(x, 0.0)
        else:
            x = jax.lax.reduce_window(x, -jnp.inf, jax.lax.max,
                                      (1, 2, 2, 1), (1, 2, 2, 1), "VALID")
        name = name_list[str(i)]
        if name in layers_to_save:
            out[name] = jnp.transpose(x, (0, 3, 1, 2))
    return out


# --------------------------- main ---------------------------------------------

if __name__ == "__main__":
    key = jax.random.PRNGKey(0)

    # Small VGG-style "features" stack (layer index -> name, as in torchvision)
    config = [("conv", 3, 8), ("relu",), ("conv", 8, 8), ("relu",),
              ("pool",), ("conv", 8, 16), ("relu",)]
    name_list = {"0": "conv1_1", "1": "relu1_1", "2": "conv1_2",
                 "3": "relu1_2", "4": "pool1", "5": "conv2_1", "6": "relu2_1"}
    layers_to_save = ["relu1_1", "relu1_2", "relu2_1"]

    k_params, k_x = jax.random.split(key)
    layers = make_vgg_layers(k_params, config)
    model = VGGFeatureExtractorPallas(layers, name_list, layers_to_save)

    # PyTorch-style NCHW input: batch=2, channels=3, 16x16 spatial
    x = jax.random.normal(k_x, (2, 3, 16, 16), jnp.float32)

    feats = model(x)
    feats = {k: jax.block_until_ready(v) for k, v in feats.items()}

    # Verify against a plain-JAX reference (same bf16-in / f32-acc numerics;
    # tolerance covers accumulation-order differences across the 3 layers).
    ref = reference_forward(x, layers, name_list, layers_to_save)
    assert set(feats.keys()) == set(ref.keys())
    for name in feats:
        assert feats[name].shape == ref[name].shape, name
        assert jnp.allclose(feats[name], ref[name], atol=1e-2, rtol=1e-2), name

    print("KERNEL_OK")
</pallas_src>

<mosaic_0001>
module attributes {stable_mosaic.version = 11 : i64} {
  func.func @_conv3x3_kernel(%arg0: i32, %arg1: memref<1x16x48xf32, #tpu.memory_space<vmem>>, %arg2: memref<3x48x128xbf16, #tpu.memory_space<vmem>>, %arg3: memref<1x128xf32, #tpu.memory_space<vmem>>, %arg4: memref<1x16x128xf32, #tpu.memory_space<vmem>>, %arg5: memref<18x48xf32, #tpu.memory_space<vmem>>) attributes {dimension_semantics = [#tpu.dimension_semantics<parallel>], iteration_bounds = array<i64: 2>, scalar_prefetch = 0 : i64, scratch_operands = 1 : i64, tpu.core_type = #tpu.core_type<tc>, window_params = [{transform_indices = @transform_0, window_bounds = array<i64: 1, 16, 48>}, {pipeline_mode = #tpu.pipeline_mode<synchronous>, transform_indices = @transform_1, window_bounds = array<i64: 3, 48, 128>}, {pipeline_mode = #tpu.pipeline_mode<synchronous>, transform_indices = @transform_2, window_bounds = array<i64: 1, 128>}, {transform_indices = @transform_3, window_bounds = array<i64: 1, 16, 128>}]} {
    %cst = arith.constant 0.000000e+00 : f32
    %0 = vector.broadcast %cst : f32 to vector<1x48xf32>
    %c0 = arith.constant 0 : index
    %c0_0 = arith.constant 0 : index
    %1 = vector.load %arg5[%c0, %c0_0] : memref<18x48xf32, #tpu.memory_space<vmem>>, vector<1x48xf32>
    tpu.vector_store %arg5[%c0, %c0_0], %0 {strides = array<i32>} : memref<18x48xf32, #tpu.memory_space<vmem>>, vector<1x48xf32>,
    %c17 = arith.constant 17 : index
    %c0_1 = arith.constant 0 : index
    %2 = vector.load %arg5[%c17, %c0_1] : memref<18x48xf32, #tpu.memory_space<vmem>>, vector<1x48xf32>
    tpu.vector_store %arg5[%c17, %c0_1], %0 {strides = array<i32>} : memref<18x48xf32, #tpu.memory_space<vmem>>, vector<1x48xf32>,
    %c0_2 = arith.constant 0 : index
    %c0_3 = arith.constant 0 : index
    %c0_4 = arith.constant 0 : index
    %3 = vector.load %arg1[%c0_2, %c0_3, %c0_4] : memref<1x16x48xf32, #tpu.memory_space<vmem>>, vector<1x16x48xf32>
    %4 = vector.shape_cast %3 : vector<1x16x48xf32> to vector<16x48xf32>
    %c1 = arith.constant 1 : index
    %c0_5 = arith.constant 0 : index
    %5 = vector.load %arg5[%c1, %c0_5] : memref<18x48xf32, #tpu.memory_space<vmem>>, vector<16x48xf32>
    tpu.vector_store %arg5[%c1, %c0_5], %4 {strides = array<i32>} : memref<18x48xf32, #tpu.memory_space<vmem>>, vector<16x48xf32>,
    %cst_6 = arith.constant 0.000000e+00 : f32
    %6 = vector.broadcast %cst_6 : f32 to vector<16x128xf32>
    %c0_7 = arith.constant 0 : index
    %c0_8 = arith.constant 0 : index
    %7 = vector.load %arg5[%c0_7, %c0_8] : memref<18x48xf32, #tpu.memory_space<vmem>>, vector<16x48xf32>
    %8 = arith.truncf %7 : vector<16x48xf32> to vector<16x48xbf16>
    %c0_9 = arith.constant 0 : index
    %c0_10 = arith.constant 0 : index
    %c0_11 = arith.constant 0 : index
    %9 = vector.load %arg2[%c0_9, %c0_10, %c0_11] : memref<3x48x128xbf16, #tpu.memory_space<vmem>>, vector<1x48x128xbf16>
    %10 = vector.shape_cast %9 : vector<1x48x128xbf16> to vector<48x128xbf16>
    %cst_12 = arith.constant dense<0.000000e+00> : vector<16x128xf32>
    %11 = tpu.matmul %8, %10, %cst_12 {dimension_numbers = #tpu.dot_dimension_numbers<[1], [0], [0], [1], [0, 0, 1, 1], [], []>} : vector<16x48xbf16>, vector<48x128xbf16>, vector<16x128xf32> -> vector<16x128xf32>
    %12 = arith.addf %6, %11 : vector<16x128xf32>
    %c1_13 = arith.constant 1 : index
    %c0_14 = arith.constant 0 : index
    %13 = vector.load %arg5[%c1_13, %c0_14] : memref<18x48xf32, #tpu.memory_space<vmem>>, vector<16x48xf32>
    %14 = arith.truncf %13 : vector<16x48xf32> to vector<16x48xbf16>
    %c1_15 = arith.constant 1 : index
    %c0_16 = arith.constant 0 : index
    %c0_17 = arith.constant 0 : index
    %15 = vector.load %arg2[%c1_15, %c0_16, %c0_17] : memref<3x48x128xbf16, #tpu.memory_space<vmem>>, vector<1x48x128xbf16>
    %16 = vector.shape_cast %15 : vector<1x48x128xbf16> to vector<48x128xbf16>
    %cst_18 = arith.constant dense<0.000000e+00> : vector<16x128xf32>
    %17 = tpu.matmul %14, %16, %cst_18 {dimension_numbers = #tpu.dot_dimension_numbers<[1], [0], [0], [1], [0, 0, 1, 1], [], []>} : vector<16x48xbf16>, vector<48x128xbf16>, vector<16x128xf32> -> vector<16x128xf32>
    %18 = arith.addf %12, %17 : vector<16x128xf32>
    %c2 = arith.constant 2 : index
    %c0_19 = arith.constant 0 : index
    %19 = vector.load %arg5[%c2, %c0_19] : memref<18x48xf32, #tpu.memory_space<vmem>>, vector<16x48xf32>
    %20 = arith.truncf %19 : vector<16x48xf32> to vector<16x48xbf16>
    %c2_20 = arith.constant 2 : index
    %c0_21 = arith.constant 0 : index
    %c0_22 = arith.constant 0 : index
    %21 = vector.load %arg2[%c2_20, %c0_21, %c0_22] : memref<3x48x128xbf16, #tpu.memory_space<vmem>>, vector<1x48x128xbf16>
    %22 = vector.shape_cast %21 : vector<1x48x128xbf16> to vector<48x128xbf16>
    %cst_23 = arith.constant dense<0.000000e+00> : vector<16x128xf32>
    %23 = tpu.matmul %20, %22, %cst_23 {dimension_numbers = #tpu.dot_dimension_numbers<[1], [0], [0], [1], [0, 0, 1, 1], [], []>} : vector<16x48xbf16>, vector<48x128xbf16>, vector<16x128xf32> -> vector<16x128xf32>
    %24 = arith.addf %18, %23 : vector<16x128xf32>
    %c0_24 = arith.constant 0 : index
    %c0_25 = arith.constant 0 : index
    %25 = vector.load %arg3[%c0_24, %c0_25] : memref<1x128xf32, #tpu.memory_space<vmem>>, vector<1x128xf32>
    %26 = vector.broadcast %25 : vector<1x128xf32> to vector<16x128xf32>
    %27 = arith.addf %24, %26 : vector<16x128xf32>
    %cst_26 = arith.constant 0.000000e+00 : f32
    %28 = vector.broadcast %cst_26 : f32 to vector<16x128xf32>
    %29 = arith.maximumf %27, %28 : vector<16x128xf32>
    %30 = vector.shape_cast %29 : vector<16x128xf32> to vector<1x16x128xf32>
    %c0_27 = arith.constant 0 : index
    %c0_28 = arith.constant 0 : index
    %c0_29 = arith.constant 0 : index
    %31 = vector.load %arg4[%c0_27, %c0_28, %c0_29] : memref<1x16x128xf32, #tpu.memory_space<vmem>>, vector<1x16x128xf32>
    tpu.vector_store %arg4[%c0_27, %c0_28, %c0_29], %30 {strides = array<i32>} : memref<1x16x128xf32, #tpu.memory_space<vmem>>, vector<1x16x128xf32>,
    return
  }
  func.func @transform_0(%arg0: i32) -> (i32, i32, i32) {
    %c0_i32 = arith.constant 0 : i32
    %c0_i32_0 = arith.constant 0 : i32
    %c0_i32_1 = arith.constant 0 : i32
    return %arg0, %c0_i32, %c0_i32_0 : i32, i32, i32
  }
  func.func @transform_1(%arg0: i32) -> (i32, i32, i32) {
    %c0_i32 = arith.constant 0 : i32
    %c0_i32_0 = arith.constant 0 : i32
    %c0_i32_1 = arith.constant 0 : i32
    %c0_i32_2 = arith.constant 0 : i32
    return %c0_i32, %c0_i32_0, %c0_i32_1 : i32, i32, i32
  }
  func.func @transform_2(%arg0: i32) -> (i32, i32) {
    %c0_i32 = arith.constant 0 : i32
    %c0_i32_0 = arith.constant 0 : i32
    %c0_i32_1 = arith.constant 0 : i32
    return %c0_i32, %c0_i32_0 : i32, i32
  }
  func.func @transform_3(%arg0: i32) -> (i32, i32, i32) {
    %c0_i32 = arith.constant 0 : i32
    %c0_i32_0 = arith.constant 0 : i32
    %c0_i32_1 = arith.constant 0 : i32
    return %arg0, %c0_i32, %c0_i32_0 : i32, i32, i32
  }
}

</mosaic_0001>

<llo_original>
// kernel: tpu_custom_call.1
$region0: #{tpu_custom_call.1}
  #allocation0 [shape = 'u32[]', space=smem, size = 0x4, offset = 0x4, fixed_abs, tag = 'smem constant byte address 0x4 - core index']
  #allocation1 [shape = 'u32[144,128]{1,0:T(1,128)}', space=vmem, size = 0x12000, scoped, tag = 'internal scratch']
  #allocation2 [shape = 'f32[18,48]{1,0:T(8,128)}', space=vmem, size = 0x3000, scoped, tag = 'scratch operand']
  %s0 = inlined_call_operand.hbm [shape: f32[2,16,48], index: 0, kind: input, shape index: {}]
  %s1 = inlined_call_operand.hbm [shape: bf16[3,48,128], index: 1, kind: input, shape index: {}]
  %s2 = inlined_call_operand.vmem [shape: f32[1,128], index: 2, kind: input, shape index: {}]
  %s3 = inlined_call_operand.hbm [shape: f32[2,16,128], index: 3, kind: output, shape index: {}]
  %s4 = sld [smem:[#allocation0]]
  $region53: #{tpu_custom_call.1} parent=0
    _
  %s6 = ssub.s32 1, %s4
  %s7 = scalar_select 0, %s6, %s4
  $region1: #{tpu_custom_call.1} parent=0
    #allocation3 [shape = 'u8[16384]{0}', space=vmem, size = 0x4000, scoped, tag = 'input window, operand 0']
    #allocation4 [shape = 's32[2]{0}', space=sflag, size = 0x8, scoped, tag = 'scoped memory for tpu_custom_call.1']
    #allocation5 [shape = 's32[2]{0}', space=sflag, size = 0x8, scoped, tag = 'scoped memory for tpu_custom_call.1']
    #allocation6 [shape = 'u8[36864]{0}', space=vmem, size = 0x9000, scoped, tag = 'input window, operand 1, single buffered']
    #allocation7 [shape = 's32[1]{0}', space=sflag, size = 0x4, scoped, tag = 'scoped memory for tpu_custom_call.1']
    #allocation8 [shape = 'u8[16384]{0}', space=vmem, size = 0x4000, scoped, tag = 'output window, operand 0']
    %8 = vsyncpa [#allocation4], 0
    %s9 = scalar_lea.sflag [#allocation4], 1
    %10 = vsyncpa %s9, 0
    %11 = vsyncpa [#allocation7], 0
    %12 = vsyncpa [#allocation5], 0
    %s13 = scalar_lea.sflag [#allocation5], 1
    %14 = vsyncpa %s13, 0
    loop: start=0, step=1, limit=4
    $region2: #{tpu_custom_call.1} parent=1 // loop_pre_header
      _
    $region3: #{tpu_custom_call.1} parent=1 // loop_header
      %s16 = sphi 0, %s20
      %p17 = scmp.ge.s32.totalorder %s16, 4
      %s26 = sphi 0, %s28
      %s29 = sphi 0, %s26
      %s30 = sphi 0, %s29
      %s46 = sphi 0, %s30
      %s50 = sphi 0, %s50
      %s52 = sphi 0, %s50
      %s53 = sphi 0, %s52
      %s67 = sphi 0, %s53
      %s71 = sphi 0, %s71
      %s73 = sphi 0, %s71
      %s74 = sphi 0, %s73
      %s88 = sphi 0, %s74
      %s94 = sphi 0, %s96
      %s97 = sphi 0, %s94
      %s98 = sphi 0, %s97
      %s114 = sphi 0, %s98
    $region4: #{tpu_custom_call.1} parent=1 // loop_header_branch
      %19 = sbr.rel (%p17) target = $region8
    $region5: #{tpu_custom_call.1} parent=1 // loop_body
      %s21 = ssub.s32 %s16, 1
      %s22 = ssub.s32 %s16, 2
      %s23 = sadd.s32 %s16, 1
      %s24 = ssub.s32 %s16, %s23
      %p25 = scmp.eq.s32.totalorder %s24, 0
      %s27 = sadd.s32 %s26, 1
      %s28 = scalar_select %p25, %s26, %s27
      %p31 = pneg %p25
      %p32 = scmp.eq.s32.totalorder %s16, 1
      %p33 = por %p31, %p32
      %p34 = scmp.ne.s32.totalorder %s26, %s29
      %p35 = scmp.eq.s32.totalorder %s16, 0
      %p36 = por %p34, %p35
      %p37 = scmp.ne.s32.totalorder %s26, %s29
      %p38 = scmp.eq.s32.totalorder %s21, 1
      %p39 = por %p37, %p38
      %p40 = scmp.ne.s32.totalorder %s29, %s30
      %p41 = scmp.eq.s32.totalorder %s21, 0
      %p42 = por %p40, %p41
      %p43 = scmp.ne.s32.totalorder %s29, %s30
      %p44 = scmp.eq.s32.totalorder %s22, 1
      %p45 = por %p43, %p44
      %p47 = scmp.ne.s32.totalorder %s30, %s46
      %p48 = scmp.eq.s32.totalorder %s22, 0
      %p49 = por %p47, %p48
      %s51 = sadd.s32 %s50, 1
      %p54 = scmp.eq.s32.totalorder %s16, 1
      %p55 = scmp.ne.s32.totalorder %s50, %s52
      %p56 = scmp.eq.s32.totalorder %s16, 0
      %p57 = por %p55, %p56
      %p58 = scmp.ne.s32.totalorder %s50, %s52
      %p59 = scmp.eq.s32.totalorder %s21, 1
      %p60 = por %p58, %p59
      %p61 = scmp.ne.s32.totalorder %s52, %s53
      %p62 = scmp.eq.s32.totalorder %s21, 0
      %p63 = por %p61, %p62
      %p64 = scmp.ne.s32.totalorder %s52, %s53
      %p65 = scmp.eq.s32.totalorder %s22, 1
      %p66 = por %p64, %p65
      %p68 = scmp.ne.s32.totalorder %s53, %s67
      %p69 = scmp.eq.s32.totalorder %s22, 0
      %p70 = por %p68, %p69
      %s72 = sadd.s32 %s71, 1
      %p75 = scmp.eq.s32.totalorder %s16, 1
      %p76 = scmp.ne.s32.totalorder %s71, %s73
      %p77 = scmp.eq.s32.totalorder %s16, 0
      %p78 = por %p76, %p77
      %p79 = scmp.ne.s32.totalorder %s71, %s73
      %p80 = scmp.eq.s32.totalorder %s21, 1
      %p81 = por %p79, %p80
      %p82 = scmp.ne.s32.totalorder %s73, %s74
      %p83 = scmp.eq.s32.totalorder %s21, 0
      %p84 = por %p82, %p83
      %p85 = scmp.ne.s32.totalorder %s73, %s74
      %p86 = scmp.eq.s32.totalorder %s22, 1
      %p87 = por %p85, %p86
      %p89 = scmp.ne.s32.totalorder %s74, %s88
      %p90 = scmp.eq.s32.totalorder %s22, 0
      %p91 = por %p89, %p90
      %s92 = ssub.s32 %s16, %s23
      %p93 = scmp.eq.s32.totalorder %s92, 0
      %s95 = sadd.s32 %s94, 1
      %s96 = scalar_select %p93, %s94, %s95
      %p99 = pneg %p93
      %p100 = scmp.eq.s32.totalorder %s16, 1
      %p101 = por %p99, %p100
      %p102 = scmp.ne.s32.totalorder %s94, %s97
      %p103 = scmp.eq.s32.totalorder %s16, 0
      %p104 = por %p102, %p103
      %p105 = scmp.ne.s32.totalorder %s94, %s97
      %p106 = scmp.eq.s32.totalorder %s21, 1
      %p107 = por %p105, %p106
      %p108 = scmp.ne.s32.totalorder %s97, %s98
      %p109 = scmp.eq.s32.totalorder %s21, 0
      %p110 = por %p108, %p109
      %p111 = scmp.ne.s32.totalorder %s97, %s98
      %p112 = scmp.eq.s32.totalorder %s22, 1
      %p113 = por %p111, %p112
      %p115 = scmp.ne.s32.totalorder %s98, %s114
      %p116 = scmp.eq.s32.totalorder %s22, 0
      %p117 = por %p115, %p116
      %p118 = scmp.le.s32.totalorder 1, %s16
      %p119 = scmp.lt.s32.totalorder %s16, 3
      %p120 = pnand %p118, %p119
      %p121 = pneg %p120
      // Predicated region
      $region9: #{tpu_custom_call.1} parent=5 // pred_check
        _
      $region10: #{tpu_custom_call.1} parent=5 // pred_check_branch
        %123 = sbr.rel (%p120) target = $region12
      $region11: #{tpu_custom_call.1} parent=5 // pred_region
        %s124 = ssub.s32 %s16, 1
        // Predicated region
        $region13: #{tpu_custom_call.1} parent=11 // pred_check
          %p125 = pneg %p63
        $region14: #{tpu_custom_call.1} parent=11 // pred_check_branch
          %127 = sbr.rel (%p125) target = $region16
        $region15: #{tpu_custom_call.1} parent=11 // pred_region
          %s129 = ssub.s32 1152, 1152
          %130 = vsyncadd [#allocation7], %s129
          %s131 = sshll.u32 [#allocation6], 4
          %s132 = int_to_ptr.vmem [resolvable:$true] %s131
          %137 = dma.hbm_to_vmem [thread:$0]  %s1, 1152, %s132, [#allocation7], 64, 64, 4
        $region16: #{tpu_custom_call.1} parent=11 // pred_fallthru
          _
        // Predicated region
        $region17: #{tpu_custom_call.1} parent=11 // pred_check
          %p138 = pneg %p84
        $region18: #{tpu_custom_call.1} parent=11 // pred_check_branch
          %140 = sbr.rel (%p138) target = $region20
        $region19: #{tpu_custom_call.1} parent=11 // pred_region
          _
        $region20: #{tpu_custom_call.1} parent=11 // pred_fallthru
          _
      $region12: #{tpu_custom_call.1} parent=5 // pred_fallthru
        _
      %p141 = scmp.lt.s32.totalorder %s16, 2
      // Predicated region
      $region21: #{tpu_custom_call.1} parent=5 // pred_check
        %p142 = pneg %p141
      $region22: #{tpu_custom_call.1} parent=5 // pred_check_branch
        %144 = sbr.rel (%p142) target = $region24
      $region23: #{tpu_custom_call.1} parent=5 // pred_region
        // Predicated region
        $region25: #{tpu_custom_call.1} parent=23 // pred_check
          %p145 = pneg %p36
        $region26: #{tpu_custom_call.1} parent=23 // pred_check_branch
          %147 = sbr.rel (%p145) target = $region28
        $region27: #{tpu_custom_call.1} parent=23 // pred_region
          %s148 = sand.u32 %s26, 1
          %s149 = scalar_lea.sflag [#allocation4], %s148
          %s150 = sand.u32 %s26, 1
          %s151 = smul.addr %s150, 16
          %s152 = scalar_lea.vmem [#allocation3], %s151
          %s154 = ssub.s32 256, 256
          %155 = vsyncadd %s149, %s154
          %s156 = smul.addr %s16, 2
          %s157 = smul.addr %s156, 128
          %s158 = scalar_lea.hbm %s0, %s157
          %s159 = sshll.u32 %s152, 4
          %s160 = int_to_ptr.vmem [resolvable:$true] %s159
          %165 = dma.hbm_to_vmem [thread:$0]  %s158, 256, %s160, %s149, 128, 128, 8
        $region28: #{tpu_custom_call.1} parent=23 // pred_fallthru
          _
      $region24: #{tpu_custom_call.1} parent=5 // pred_fallthru
        _
      %p166 = scmp.le.s32.totalorder 1, %s16
      %p167 = scmp.lt.s32.totalorder %s16, 3
      %p168 = pnand %p166, %p167
      %p169 = pneg %p168
      // Predicated region
      $region29: #{tpu_custom_call.1} parent=5 // pred_check
        _
      $region30: #{tpu_custom_call.1} parent=5 // pred_check_branch
        %171 = sbr.rel (%p168) target = $region32
      $region31: #{tpu_custom_call.1} parent=5 // pred_region
        %s172 = ssub.s32 %s16, 1
        %s173 = sand.u32 %s29, 1
        %s174 = scalar_lea.sflag [#allocation4], %s173
        %s175 = sand.u32 %s29, 1
        %s176 = smul.addr %s175, 16
        %s177 = scalar_lea.vmem [#allocation3], %s176
        // Predicated region
        $region33: #{tpu_custom_call.1} parent=31 // pred_check
          %p178 = pneg %p42
        $region34: #{tpu_custom_call.1} parent=31 // pred_check_branch
          %180 = sbr.rel (%p178) target = $region36
        $region35: #{tpu_custom_call.1} parent=31 // pred_region
          %181 = dma.done %s174, 256
        $region36: #{tpu_custom_call.1} parent=31 // pred_fallthru
          _
        // Predicated region
        $region37: #{tpu_custom_call.1} parent=31 // pred_check
          %p182 = pneg %p63
        $region38: #{tpu_custom_call.1} parent=31 // pred_check_branch
          %184 = sbr.rel (%p182) target = $region40
        $region39: #{tpu_custom_call.1} parent=31 // pred_region
          %185 = dma.done [#allocation7], 1152
        $region40: #{tpu_custom_call.1} parent=31 // pred_fallthru
          _
        %s186 = sand.u32 %s29, 1
        %s187 = scalar_lea.sflag [#allocation4], %s186
        %s188 = sand.u32 %s29, 1
        %s189 = smul.addr %s188, 16
        %s190 = scalar_lea.vmem [#allocation3], %s189
        %p191 = pneg %p42
        %p192 = pneg %p39
        %p193 = pneg %p63
        %p194 = pneg %p60
        %p195 = pneg %p84
        %p196 = pneg %p81
        %p197 = pneg %p110
        %p198 = pneg %p107
        %s199 = sand.u32 %s97, 1
        %s200 = scalar_lea.sflag [#allocation5], %s199
        %s201 = sand.u32 %s97, 1
        %s202 = smul.addr %s201, 16
        %s203 = scalar_lea.vmem [#allocation8], %s202
        %vm205 = vcmask 385024
        %206 = vst.msk [vmem:[#allocation2] sm:$0x1] %vm205, 0.0
        %207 = vst.msk [vmem:[#allocation2 + $0x11] sm:$0x1] %vm205, 0.0
        %v208 = vld [vmem:[%s177] sm:$0xff]
        %v209 = vld [vmem:[%s177 + $0x8] sm:$0xff]
        %vm210 = vcmask 392192
        %211 = vst.msk [vmem:[#allocation2 + $0x1] sm:$0xff] %vm210, %v208
        %212 = vst.msk [vmem:[#allocation2 + $0x9] sm:$0xff] %vm210, %v209
        %v213 = vld [vmem:[#allocation2] sm:$0xff]
        %v214 = vld [vmem:[#allocation2 + $0x8] sm:$0xff]
        %v215 = vpack.c.bf16 %v214, %v213
        %v216 = vld [vmem:[#allocation6] sm:$0xf]
        %v217 = vld [vmem:[#allocation6 + $0x4] sm:$0xf]
        %v218 = vld [vmem:[#allocation6 + $0x8] sm:$0xf]
        %v219 = vld [vmem:[#allocation6 + $0xc] sm:$0xf]
        %v220 = vld [vmem:[#allocation6 + $0x10] sm:$0xf]
        %v221 = vld [vmem:[#allocation6 + $0x14] sm:$0xf]
        %v222 = vld [vmem:[#allocation2 + $0x1] sm:$0xff]
        %v223 = vld [vmem:[#allocation2 + $0x9] sm:$0xff]
        %v224 = vpack.c.bf16 %v223, %v222
        %s225 = scalar_lea.vmem [#allocation6], 24
        %v226 = vld [vmem:[%s225] sm:$0xf]
        %v227 = vld [vmem:[%s225 + $0x4] sm:$0xf]
        %v228 = vld [vmem:[%s225 + $0x8] sm:$0xf]
        %v229 = vld [vmem:[%s225 + $0xc] sm:$0xf]
        %v230 = vld [vmem:[%s225 + $0x10] sm:$0xf]
        %v231 = vld [vmem:[%s225 + $0x14] sm:$0xf]
        %v238 = vunpack.c.l.b16 %v226
        %v239 = vunpack.c.l.b16 %v227
        %v240 = vunpack.c.l.b16 %v228
        %v241 = vunpack.c.l.b16 %v229
        %v242 = vunpack.c.l.b16 %v230
        %v243 = vunpack.c.l.b16 %v231
        %v244 = vpack.c.b16 %v239, %v238
        %v245 = vpack.c.b16 %v241, %v240
        %v246 = vpack.c.b16 %v243, %v242
        %v251 = vsel %vm210, %v224, 0
        %253 = vmatprep.subr.bf16.mxu0 0
        %254 = vmatpush1.bf16.msra.mxu0 0
        %255 = vmatprep.subr.bf16.mxu0 0
        %256 = vmatpush1.bf16.msra.mxu0 0
        %257 = vmatprep.subr.bf16.mxu0 0
        %258 = vmatpush1.bf16.msra.mxu0 0
        %259 = vmatprep.subr.bf16.mxu0 0
        %260 = vmatpush1.bf16.msra.mxu0 0
        %261 = vmatprep.subr.bf16.mxu0 0
        %262 = vmatpush1.bf16.msra.mxu0 0
        %263 = vmatprep.subr.bf16.mxu0 0
        %264 = vmatpush1.bf16.msra.mxu0 %v246
        %265 = vmatprep.subr.bf16.mxu0 0
        %266 = vmatpush1.bf16.msra.mxu0 %v245
        %267 = vmatprep.subr.bf16.mxu0 0
        %268 = vmatpush1.bf16.msra.mxu0 %v244
        %269 = vmatprep.subr.bf16.mxu0 0
        %270 = vmatpush2.bf16.msra.mxu0 0
        %271 = vmatprep.subr.bf16.mxu0 0
        %272 = vmatpush2.bf16.msra.mxu0 0
        %273 = vmatprep.subr.bf16.mxu0 0
        %274 = vmatpush2.bf16.msra.mxu0 0
        %275 = vmatprep.subr.bf16.mxu0 0
        %276 = vmatpush2.bf16.msra.mxu0 0
        %277 = vmatprep.subr.bf16.mxu0 0
        %278 = vmatpush2.bf16.msra.mxu0 0
        %279 = vmatprep.subr.bf16.mxu0 0
        %280 = vmatpush2.bf16.msra.mxu0 0
        %281 = vmatprep.subr.bf16.mxu0 0
        %282 = vmatpush2.bf16.msra.mxu0 0
        %283 = vmatprep.subr.bf16.mxu0 0
        %284 = vmatpush2.bf16.msra.mxu0 0
        %285 = vmatprep.mubr.bf16.mxu0 0
        %286 = vmatmul.mubr.bf16.gmra.mxu0 %v251
        %v287 = vpop.f32.mrf.mxu0
        %v288 = vadd.f32 0.0, %v287
        %v289 = vpop.f32.mrf.mxu0
        %v290 = vpop.f32.mrf.mxu0
        %v291 = vadd.f32 0.0, %v290
        %v292 = vpop.f32.mrf.mxu0
        %293 = vdwg.mxu0
        %v300 = vunpack.c.l.b16 %v216
        %v301 = vunpack.c.l.b16 %v217
        %v302 = vunpack.c.l.b16 %v218
        %v303 = vunpack.c.l.b16 %v219
        %v304 = vunpack.c.l.b16 %v220
        %v305 = vunpack.c.l.b16 %v221
        %v306 = vpack.c.b16 %v301, %v300
        %v307 = vpack.c.b16 %v303, %v302
        %v308 = vpack.c.b16 %v305, %v304
        %v313 = vsel %vm210, %v215, 0
        %315 = vmatprep.subr.bf16.mxu0 0
        %316 = vmatpush1.bf16.msra.mxu0 0
        %317 = vmatprep.subr.bf16.mxu0 0
        %318 = vmatpush1.bf16.msra.mxu0 0
        %319 = vmatprep.subr.bf16.mxu0 0
        %320 = vmatpush1.bf16.msra.mxu0 0
        %321 = vmatprep.subr.bf16.mxu0 0
        %322 = vmatpush1.bf16.msra.mxu0 0
        %323 = vmatprep.subr.bf16.mxu0 0
        %324 = vmatpush1.bf16.msra.mxu0 0
        %325 = vmatprep.subr.bf16.mxu0 0
        %326 = vmatpush1.bf16.msra.mxu0 %v308
        %327 = vmatprep.subr.bf16.mxu0 0
        %328 = vmatpush1.bf16.msra.mxu0 %v307
        %329 = vmatprep.subr.bf16.mxu0 0
        %330 = vmatpush1.bf16.msra.mxu0 %v306
        %331 = vmatprep.subr.bf16.mxu0 0
        %332 = vmatpush2.bf16.msra.mxu0 0
        %333 = vmatprep.subr.bf16.mxu0 0
        %334 = vmatpush2.bf16.msra.mxu0 0
        %335 = vmatprep.subr.bf16.mxu0 0
        %336 = vmatpush2.bf16.msra.mxu0 0
        %337 = vmatprep.subr.bf16.mxu0 0
        %338 = vmatpush2.bf16.msra.mxu0 0
        %339 = vmatprep.subr.bf16.mxu0 0
        %340 = vmatpush2.bf16.msra.mxu0 0
        %341 = vmatprep.subr.bf16.mxu0 0
        %342 = vmatpush2.bf16.msra.mxu0 0
        %343 = vmatprep.subr.bf16.mxu0 0
        %344 = vmatpush2.bf16.msra.mxu0 0
        %345 = vmatprep.subr.bf16.mxu0 0
        %346 = vmatpush2.bf16.msra.mxu0 0
        %347 = vmatprep.mubr.bf16.mxu0 0
        %348 = vmatmul.mubr.bf16.gmra.mxu0 %v313
        %v349 = vpop.f32.mrf.mxu0
        %v350 = vadd.f32 %v288, %v349
        %v351 = vpop.f32.mrf.mxu0
        %v352 = vpop.f32.mrf.mxu0
        %v353 = vadd.f32 %v291, %v352
        %v354 = vpop.f32.mrf.mxu0
        %355 = vdwg.mxu0
        %v356 = vld [vmem:[#allocation2 + $0x2] sm:$0xff]
        %v357 = vld [vmem:[#allocation2 + $0xa] sm:$0xff]
        %v358 = vpack.c.bf16 %v357, %v356
        %s359 = scalar_lea.vmem [#allocation6], 48
        %v360 = vld [vmem:[%s359] sm:$0xf]
        %v361 = vld [vmem:[%s359 + $0x4] sm:$0xf]
        %v362 = vld [vmem:[%s359 + $0x8] sm:$0xf]
        %v363 = vld [vmem:[%s359 + $0xc] sm:$0xf]
        %v364 = vld [vmem:[%s359 + $0x10] sm:$0xf]
        %v365 = vld [vmem:[%s359 + $0x14] sm:$0xf]
        %v372 = vunpack.c.l.b16 %v360
        %v373 = vunpack.c.l.b16 %v361
        %v374 = vunpack.c.l.b16 %v362
        %v375 = vunpack.c.l.b16 %v363
        %v376 = vunpack.c.l.b16 %v364
        %v377 = vunpack.c.l.b16 %v365
        %v378 = vpack.c.b16 %v373, %v372
        %v379 = vpack.c.b16 %v375, %v374
        %v380 = vpack.c.b16 %v377, %v376
        %v385 = vsel %vm210, %v358, 0
        %387 = vmatprep.subr.bf16.mxu0 0
        %388 = vmatpush1.bf16.msra.mxu0 0
        %389 = vmatprep.subr.bf16.mxu0 0
        %390 = vmatpush1.bf16.msra.mxu0 0
        %391 = vmatprep.subr.bf16.mxu0 0
        %392 = vmatpush1.bf16.msra.mxu0 0
        %393 = vmatprep.subr.bf16.mxu0 0
        %394 = vmatpush1.bf16.msra.mxu0 0
        %395 = vmatprep.subr.bf16.mxu0 0
        %396 = vmatpush1.bf16.msra.mxu0 0
        %397 = vmatprep.subr.bf16.mxu0 0
        %398 = vmatpush1.bf16.msra.mxu0 %v380
        %399 = vmatprep.subr.bf16.mxu0 0
        %400 = vmatpush1.bf16.msra.mxu0 %v379
        %401 = vmatprep.subr.bf16.mxu0 0
        %402 = vmatpush1.bf16.msra.mxu0 %v378
        %403 = vmatprep.subr.bf16.mxu0 0
        %404 = vmatpush2.bf16.msra.mxu0 0
        %405 = vmatprep.subr.bf16.mxu0 0
        %406 = vmatpush2.bf16.msra.mxu0 0
        %407 = vmatprep.subr.bf16.mxu0 0
        %408 = vmatpush2.bf16.msra.mxu0 0
        %409 = vmatprep.subr.bf16.mxu0 0
        %410 = vmatpush2.bf16.msra.mxu0 0
        %411 = vmatprep.subr.bf16.mxu0 0
        %412 = vmatpush2.bf16.msra.mxu0 0
        %413 = vmatprep.subr.bf16.mxu0 0
        %414 = vmatpush2.bf16.msra.mxu0 0
        %415 = vmatprep.subr.bf16.mxu0 0
        %416 = vmatpush2.bf16.msra.mxu0 0
        %417 = vmatprep.subr.bf16.mxu0 0
        %418 = vmatpush2.bf16.msra.mxu0 0
        %419 = vmatprep.mubr.bf16.mxu0 0
        %420 = vmatmul.mubr.bf16.gmra.mxu0 %v385
        %v421 = vpop.f32.mrf.mxu0
        %v422 = vadd.f32 0.0, %v421
        %v423 = vpop.f32.mrf.mxu0
        %v424 = vpop.f32.mrf.mxu0
        %v425 = vadd.f32 0.0, %v424
        %v426 = vpop.f32.mrf.mxu0
        %427 = vdwg.mxu0
        %v428 = vadd.f32 %v350, %v422
        %v429 = vadd.f32 %v353, %v425
        %v430 = vld [vmem:[%s2] sm:$0x1]
        %v432 = vlaneseq
        %v433 = vshrl.u32 %v432, 7
        %v434 = vsub.s32 0, %v433
        %v435 = vrot.slane %v430, %v434
        %v437 = vadd.f32 %v428, %v435
        %v438 = vadd.f32 %v429, %v435
        %v439 = vmax.f32 %v437, 0.0
        %v440 = vmax.f32 %v438, 0.0
        %441 = vst [vmem:[%s203] sm:$0xff] %v439
        %442 = vst [vmem:[%s203 + $0x8] sm:$0xff] %v440
        %s443 = sand.u32 %s97, 1
        %s444 = scalar_lea.sflag [#allocation5], %s443
        %s445 = sand.u32 %s97, 1
        %s446 = smul.addr %s445, 16
        %s447 = scalar_lea.vmem [#allocation8], %s446
        // Predicated region
        $region41: #{tpu_custom_call.1} parent=31 // pred_check
          %p448 = pneg %p107
        $region42: #{tpu_custom_call.1} parent=31 // pred_check_branch
          %450 = sbr.rel (%p448) target = $region44
        $region43: #{tpu_custom_call.1} parent=31 // pred_region
          %s452 = ssub.s32 256, 256
          %453 = vsyncadd %s444, %s452
          %s454 = smul.addr %s21, 2
          %s455 = smul.addr %s454, 128
          %s456 = scalar_lea.hbm %s3, %s455
          %s457 = sshll.u32 %s447, 4
          %s458 = int_to_ptr.vmem [resolvable:$true] %s457
          %463 = dma.vmem_to_hbm [thread:$0]  %s458, 256, %s456, %s444, 128, 128, 8
        $region44: #{tpu_custom_call.1} parent=31 // pred_fallthru
          _
      $region32: #{tpu_custom_call.1} parent=5 // pred_fallthru
        _
      %p464 = scmp.le.s32.totalorder 2, %s16
      // Predicated region
      $region45: #{tpu_custom_call.1} parent=5 // pred_check
        %p465 = pneg %p464
      $region46: #{tpu_custom_call.1} parent=5 // pred_check_branch
        %467 = sbr.rel (%p465) target = $region48
      $region47: #{tpu_custom_call.1} parent=5 // pred_region
        %s468 = ssub.s32 %s16, 2
        // Predicated region
        $region49: #{tpu_custom_call.1} parent=47 // pred_check
          %p469 = pneg %p113
        $region50: #{tpu_custom_call.1} parent=47 // pred_check_branch
          %471 = sbr.rel (%p469) target = $region52
        $region51: #{tpu_custom_call.1} parent=47 // pred_region
          %s472 = sand.u32 %s98, 1
          %s473 = scalar_lea.sflag [#allocation5], %s472
          %s474 = sand.u32 %s98, 1
          %s475 = smul.addr %s474, 16
          %s476 = scalar_lea.vmem [#allocation8], %s475
          %477 = dma.done %s473, 256
        $region52: #{tpu_custom_call.1} parent=47 // pred_fallthru
          _
      $region48: #{tpu_custom_call.1} parent=5 // pred_fallthru
        _
    $region6: #{tpu_custom_call.1} parent=1 // loop_footer
      %s20 = sadd.s32 1, %s16
    $region7: #{tpu_custom_call.1} parent=1 // loop_footer_branch
      %15 = sbr.rel target = $region3
    $region8: #{tpu_custom_call.1} parent=1 // loop_exit
      _
    %478 = vsyncpa [#allocation4], 1
    %s479 = scalar_lea.sflag [#allocation4], 1
    %480 = vsyncpa %s479, 1
    %481 = vsyncpa [#allocation7], 1
    %482 = vsyncpa [#allocation5], 1
    %s483 = scalar_lea.sflag [#allocation5], 1
    %484 = vsyncpa %s483, 1

</llo_original>
